<compile_context>
chip_gen: v5e
topology: v5e:2x2
jax: 0.10.0
libtpu: 0.0.40
codegen_flags: <defaults>
</compile_context>

<pallas_src>
import jax
import jax.numpy as jnp
from jax.experimental import pallas as pl
from jax.experimental.pallas import tpu as pltpu

C1 = 16  # conv channels (fixed by the PyTorch module)


def deepant_kernel(x_ref, w1_ref, b1_ref, w2_ref, b2_ref,
                   wd1_ref, bd1_ref, wd2_ref, bd2_ref, out_ref):
    x = x_ref[...]                                                    # (BT, L*D) bf16

    # ---- conv1d_1 + bias + ReLU: one banded lane-dense matmul ----
    y1 = jnp.dot(x, w1_ref[...], preferred_element_type=jnp.float32) + b1_ref[...]
    y1 = jnp.maximum(y1, 0.0)                                         # (BT, L1*16) f32

    # ---- maxpool1d(k=2) over time: max of the tile and its 16-lane-shifted copy.
    # Pooled value for window t2 lands at lanes [32*t2 + c]; the other lanes are
    # never read because the next banded weight has zero rows there.
    p1 = jnp.maximum(y1[:, :-C1], y1[:, C1:])                         # (BT, (L1-1)*16)

    # ---- conv1d_2 + bias + ReLU: banded matmul on the un-compacted pooled layout ----
    y2 = jnp.dot(p1.astype(jnp.bfloat16), w2_ref[...],
                 preferred_element_type=jnp.float32) + b2_ref[...]
    y2 = jnp.maximum(y2, 0.0)                                         # (BT, L3*16) f32

    # ---- maxpool1d(k=2): pooled features for the single flatten window at lanes 0..15 ----
    p2 = jnp.maximum(y2[:, :-C1], y2[:, C1:])                         # (BT, (L3-1)*16)

    # ---- flatten + dense_1 + ReLU (+ dropout == identity in eval), 128-lane padded ----
    h = jnp.dot(p2.astype(jnp.bfloat16), wd1_ref[...],
                preferred_element_type=jnp.float32) + bd1_ref[...]
    h = jnp.maximum(h, 0.0)                                           # (BT, 128) f32

    # ---- dense_2: narrow (BT, D) store (no zero-padded writeback) ----
    out = jnp.dot(h.astype(jnp.bfloat16), wd2_ref[...],
                  preferred_element_type=jnp.float32) + bd2_ref[...]
    out_ref[...] = out.astype(out_ref.dtype)                          # (BT, D)


def deepant_forward(x, params, block_b=2048):
    """x: (B, L, D) float32.  Returns (B, D) float32."""
    B, L, D = x.shape
    LD = L * D
    L1 = L - 2
    L2 = L1 // 2
    L3 = L2 - 2
    L4 = L3 // 2
    assert L3 >= 2 and L4 * C1 == 16, (
        "dense_1 is Linear(16, 40): requires flatten width == 16 (LOOKBACK == 10 or 11)")

    BT = min(B, block_b)
    nb = -(-B // BT)                     # cdiv
    # v7x megacore: make sure the 'parallel' batch axis has >= 2 steps so both
    # TensorCores get work (neutral on v5e/v6e: one extra ~0.35us grid step).
    if nb == 1 and B >= 16 and B % 16 == 0:
        BT, nb = B // 2, 2
    Bp = nb * BT
    if nb > 1:
        assert BT % 8 == 0               # (8,128) constraint on the (BT, *) blocks

    # Flatten + cast BEFORE the kernel: the HBM->VMEM stream is lane-major bf16.
    x2 = x.reshape(B, LD).astype(jnp.bfloat16)
    if Bp != B:
        x2 = jnp.pad(x2, ((0, Bp - B), (0, 0)))

    weights = (params["w1m"], params["b1t"], params["w2m"], params["b2t"],
               params["wd1m"], params["bd1p"], params["wd2m"], params["bd2p"])

    def resident(a):                     # full-array, VMEM-resident across the grid
        nd = a.ndim
        return pl.BlockSpec(a.shape, lambda i, _nd=nd: (0,) * _nd)

    out = pl.pallas_call(
        deepant_kernel,
        out_shape=jax.ShapeDtypeStruct((Bp, D), jnp.float32),
        grid=(nb,),
        in_specs=[pl.BlockSpec((BT, LD), lambda i: (i, 0))]
                 + [resident(a) for a in weights],
        out_specs=pl.BlockSpec((BT, D), lambda i: (i, 0)),
        compiler_params=pltpu.CompilerParams(
            dimension_semantics=("parallel",),
            # explicit scoped-VMEM budget: BT=2048 tile uses ~8-10 MiB; 32 MiB is
            # safe on v5e/v6e (128 MiB phys) and leaves headroom on v7x (64 MiB).
            vmem_limit_bytes=32 * 1024 * 1024),
    )(x2, *weights)
    return out[:B]


def init_params(key, dimension, lookback):
    """Deterministic init mimicking PyTorch defaults (U(-1/sqrt(fan_in), +)).
    Weights are pre-folded into banded / lane-padded bf16 matrices so the kernel is
    just 4 lane-dense matmuls + f32 bias/ReLU/max."""
    D, L = dimension, lookback
    L1 = L - 2
    L2 = L1 // 2
    L3 = L2 - 2
    ks = jax.random.split(key, 8)

    def u(k, shape, fan_in):
        b = 1.0 / jnp.sqrt(fan_in)
        return jax.random.uniform(k, shape, jnp.float32, -b, b)

    # torch Conv1d weights: (out, in, k); Linear weights: (out, in)
    w1 = u(ks[0], (16, D, 3), D * 3)
    b1 = u(ks[1], (16,), D * 3)
    w2 = u(ks[2], (16, 16, 3), 16 * 3)
    b2 = u(ks[3], (16,), 16 * 3)
    wd1 = u(ks[4], (40, 16), 16)
    bd1 = u(ks[5], (40,), 16)
    wd2 = u(ks[6], (D, 40), 40)
    bd2 = u(ks[7], (D,), 40)

    # --- conv1d_1 as a block-banded (L*D, L1*16) matrix on the flattened input ---
    # row index = t_in*D + d, col index = t_out*16 + c_out
    w1m = jnp.zeros((L * D, L1 * 16), jnp.float32)
    for t in range(L1):
        for k in range(3):
            w1m = w1m.at[(t + k) * D:(t + k + 1) * D, t * 16:(t + 1) * 16].set(w1[:, :, k].T)
    b1t = jnp.tile(b1, L1).reshape(1, L1 * 16)

    # --- conv1d_2 as a banded ((L1-1)*16, L3*16) matrix reading the pooled layout ---
    # pooled window t2 lives at rows 32*t2 + c_in; all other rows are zero
    w2m = jnp.zeros(((L1 - 1) * 16, L3 * 16), jnp.float32)
    for t in range(L3):
        for k in range(3):
            r = 32 * (t + k)
            w2m = w2m.at[r:r + 16, t * 16:(t + 1) * 16].set(w2[:, :, k].T)
    b2t = jnp.tile(b2, L3).reshape(1, L3 * 16)

    # --- dense_1: K = pooled width (L3-1)*16 (valid features at lanes 0..15),
    #     N zero-padded 40 -> 128 so h is full-lane ---
    wd1m = jnp.zeros(((L3 - 1) * 16, 128), jnp.float32).at[:16, :40].set(wd1.T)
    bd1p = jnp.zeros((1, 128), jnp.float32).at[:, :40].set(bd1)

    # --- dense_2: K = 128 (padded h; lanes 40..127 are exactly zero), N = D ---
    wd2m = jnp.zeros((128, D), jnp.float32).at[:40, :].set(wd2.T)
    bd2p = bd2.reshape(1, D)

    bf = lambda a: a.astype(jnp.bfloat16)
    return dict(
        w1m=bf(w1m), b1t=b1t,
        w2m=bf(w2m), b2t=b2t,
        wd1m=bf(wd1m), bd1p=bd1p,
        wd2m=bf(wd2m), bd2p=bd2p,
        # f32 copies of the bf16-rounded weights for the pure-JAX reference
        _w1=bf(w1).astype(jnp.float32), _b1=b1,
        _w2=bf(w2).astype(jnp.float32), _b2=b2,
        _wd1=bf(wd1).astype(jnp.float32), _bd1=bd1,
        _wd2=bf(wd2).astype(jnp.float32), _bd2=bd2,
    )


def reference_forward(x, p):
    """Pure-JAX replica of the PyTorch forward (eval mode) for validation."""
    xt = jnp.transpose(x, (0, 2, 1))                     # (B, D, L)  NCW
    dn = ("NCH", "OIH", "NCH")
    y = jax.lax.conv_general_dilated(xt, p["_w1"], (1,), "VALID",
                                     dimension_numbers=dn) + p["_b1"][None, :, None]
    y = jnp.maximum(y, 0.0)
    Lp = y.shape[-1] // 2
    y = y[..., :2 * Lp].reshape(y.shape[0], y.shape[1], Lp, 2).max(-1)
    y = jax.lax.conv_general_dilated(y, p["_w2"], (1,), "VALID",
                                     dimension_numbers=dn) + p["_b2"][None, :, None]
    y = jnp.maximum(y, 0.0)
    Lp = y.shape[-1] // 2
    y = y[..., :2 * Lp].reshape(y.shape[0], y.shape[1], Lp, 2).max(-1)
    flat = y.reshape(y.shape[0], -1)                     # (B, 16)
    h = jnp.maximum(flat @ p["_wd1"].T + p["_bd1"], 0.0)
    return h @ p["_wd2"].T + p["_bd2"]


if __name__ == "__main__":
    B, LOOKBACK, DIMENSION = 2, 10, 8   # LOOKBACK=10 -> flatten yields exactly 16 features
    key = jax.random.PRNGKey(0)
    kx, kp = jax.random.split(key)
    x = jax.random.normal(kx, (B, LOOKBACK, DIMENSION), jnp.float32)
    params = init_params(kp, DIMENSION, LOOKBACK)

    out = deepant_forward(x, params)
    out = jax.block_until_ready(out)

    # Reference sees the same bf16-rounded input/weights (kernel gets bf16 x).
    x_q = x.astype(jnp.bfloat16).astype(jnp.float32)
    ref = reference_forward(x_q, params)

    assert out.shape == (B, DIMENSION)
    assert jnp.allclose(out, ref, atol=2e-2, rtol=2e-2), "mismatch vs reference"
    print("KERNEL_OK")
</pallas_src>

<mosaic_0001>
module attributes {stable_mosaic.version = 11 : i64} {
  func.func @deepant_kernel(%arg0: i32, %arg1: memref<2x80xbf16, #tpu.memory_space<vmem>>, %arg2: memref<80x128xbf16, #tpu.memory_space<vmem>>, %arg3: memref<1x128xf32, #tpu.memory_space<vmem>>, %arg4: memref<112x32xbf16, #tpu.memory_space<vmem>>, %arg5: memref<1x32xf32, #tpu.memory_space<vmem>>, %arg6: memref<16x128xbf16, #tpu.memory_space<vmem>>, %arg7: memref<1x128xf32, #tpu.memory_space<vmem>>, %arg8: memref<128x8xbf16, #tpu.memory_space<vmem>>, %arg9: memref<1x8xf32, #tpu.memory_space<vmem>>, %arg10: memref<2x8xf32, #tpu.memory_space<vmem>>) attributes {dimension_semantics = [#tpu.dimension_semantics<parallel>], iteration_bounds = array<i64: 1>, scalar_prefetch = 0 : i64, scratch_operands = 0 : i64, tpu.core_type = #tpu.core_type<tc>, window_params = [{transform_indices = @transform_0, window_bounds = array<i64: 2, 80>}, {pipeline_mode = #tpu.pipeline_mode<synchronous>, transform_indices = @transform_1, window_bounds = array<i64: 80, 128>}, {pipeline_mode = #tpu.pipeline_mode<synchronous>, transform_indices = @transform_2, window_bounds = array<i64: 1, 128>}, {pipeline_mode = #tpu.pipeline_mode<synchronous>, transform_indices = @transform_3, window_bounds = array<i64: 112, 32>}, {pipeline_mode = #tpu.pipeline_mode<synchronous>, transform_indices = @transform_4, window_bounds = array<i64: 1, 32>}, {pipeline_mode = #tpu.pipeline_mode<synchronous>, transform_indices = @transform_5, window_bounds = array<i64: 16, 128>}, {pipeline_mode = #tpu.pipeline_mode<synchronous>, transform_indices = @transform_6, window_bounds = array<i64: 1, 128>}, {pipeline_mode = #tpu.pipeline_mode<synchronous>, transform_indices = @transform_7, window_bounds = array<i64: 128, 8>}, {pipeline_mode = #tpu.pipeline_mode<synchronous>, transform_indices = @transform_8, window_bounds = array<i64: 1, 8>}, {transform_indices = @transform_9, window_bounds = array<i64: 2, 8>}]} {
    %c0 = arith.constant 0 : index
    %c0_0 = arith.constant 0 : index
    %0 = vector.load %arg1[%c0, %c0_0] : memref<2x80xbf16, #tpu.memory_space<vmem>>, vector<2x80xbf16>
    %c0_1 = arith.constant 0 : index
    %c0_2 = arith.constant 0 : index
    %1 = vector.load %arg2[%c0_1, %c0_2] : memref<80x128xbf16, #tpu.memory_space<vmem>>, vector<80x128xbf16>
    %cst = arith.constant dense<0.000000e+00> : vector<2x128xf32>
    %2 = tpu.matmul %0, %1, %cst {dimension_numbers = #tpu.dot_dimension_numbers<[1], [0], [0], [1], [0, 0, 1, 1], [], []>} : vector<2x80xbf16>, vector<80x128xbf16>, vector<2x128xf32> -> vector<2x128xf32>
    %c0_3 = arith.constant 0 : index
    %c0_4 = arith.constant 0 : index
    %3 = vector.load %arg3[%c0_3, %c0_4] : memref<1x128xf32, #tpu.memory_space<vmem>>, vector<1x128xf32>
    %4 = vector.broadcast %3 : vector<1x128xf32> to vector<2x128xf32>
    %5 = arith.addf %2, %4 : vector<2x128xf32>
    %cst_5 = arith.constant 0.000000e+00 : f32
    %6 = vector.broadcast %cst_5 : f32 to vector<2x128xf32>
    %7 = arith.maximumf %5, %6 : vector<2x128xf32>
    %8 = vector.extract_strided_slice %7 {offsets = [0, 0], sizes = [2, 112], strides = [1, 1]} : vector<2x128xf32> to vector<2x112xf32>
    %9 = vector.extract_strided_slice %7 {offsets = [0, 16], sizes = [2, 112], strides = [1, 1]} : vector<2x128xf32> to vector<2x112xf32>
    %10 = arith.maximumf %8, %9 : vector<2x112xf32>
    %11 = arith.truncf %10 : vector<2x112xf32> to vector<2x112xbf16>
    %c0_6 = arith.constant 0 : index
    %c0_7 = arith.constant 0 : index
    %12 = vector.load %arg4[%c0_6, %c0_7] : memref<112x32xbf16, #tpu.memory_space<vmem>>, vector<112x32xbf16>
    %cst_8 = arith.constant dense<0.000000e+00> : vector<2x32xf32>
    %13 = tpu.matmul %11, %12, %cst_8 {dimension_numbers = #tpu.dot_dimension_numbers<[1], [0], [0], [1], [0, 0, 1, 1], [], []>} : vector<2x112xbf16>, vector<112x32xbf16>, vector<2x32xf32> -> vector<2x32xf32>
    %c0_9 = arith.constant 0 : index
    %c0_10 = arith.constant 0 : index
    %14 = vector.load %arg5[%c0_9, %c0_10] : memref<1x32xf32, #tpu.memory_space<vmem>>, vector<1x32xf32>
    %15 = vector.broadcast %14 : vector<1x32xf32> to vector<2x32xf32>
    %16 = arith.addf %13, %15 : vector<2x32xf32>
    %cst_11 = arith.constant 0.000000e+00 : f32
    %17 = vector.broadcast %cst_11 : f32 to vector<2x32xf32>
    %18 = arith.maximumf %16, %17 : vector<2x32xf32>
    %19 = vector.extract_strided_slice %18 {offsets = [0, 0], sizes = [2, 16], strides = [1, 1]} : vector<2x32xf32> to vector<2x16xf32>
    %20 = vector.extract_strided_slice %18 {offsets = [0, 16], sizes = [2, 16], strides = [1, 1]} : vector<2x32xf32> to vector<2x16xf32>
    %21 = arith.maximumf %19, %20 : vector<2x16xf32>
    %22 = arith.truncf %21 : vector<2x16xf32> to vector<2x16xbf16>
    %c0_12 = arith.constant 0 : index
    %c0_13 = arith.constant 0 : index
    %23 = vector.load %arg6[%c0_12, %c0_13] : memref<16x128xbf16, #tpu.memory_space<vmem>>, vector<16x128xbf16>
    %cst_14 = arith.constant dense<0.000000e+00> : vector<2x128xf32>
    %24 = tpu.matmul %22, %23, %cst_14 {dimension_numbers = #tpu.dot_dimension_numbers<[1], [0], [0], [1], [0, 0, 1, 1], [], []>} : vector<2x16xbf16>, vector<16x128xbf16>, vector<2x128xf32> -> vector<2x128xf32>
    %c0_15 = arith.constant 0 : index
    %c0_16 = arith.constant 0 : index
    %25 = vector.load %arg7[%c0_15, %c0_16] : memref<1x128xf32, #tpu.memory_space<vmem>>, vector<1x128xf32>
    %26 = vector.broadcast %25 : vector<1x128xf32> to vector<2x128xf32>
    %27 = arith.addf %24, %26 : vector<2x128xf32>
    %cst_17 = arith.constant 0.000000e+00 : f32
    %28 = vector.broadcast %cst_17 : f32 to vector<2x128xf32>
    %29 = arith.maximumf %27, %28 : vector<2x128xf32>
    %30 = arith.truncf %29 : vector<2x128xf32> to vector<2x128xbf16>
    %c0_18 = arith.constant 0 : index
    %c0_19 = arith.constant 0 : index
    %31 = vector.load %arg8[%c0_18, %c0_19] : memref<128x8xbf16, #tpu.memory_space<vmem>>, vector<128x8xbf16>
    %cst_20 = arith.constant dense<0.000000e+00> : vector<2x8xf32>
    %32 = tpu.matmul %30, %31, %cst_20 {dimension_numbers = #tpu.dot_dimension_numbers<[1], [0], [0], [1], [0, 0, 1, 1], [], []>} : vector<2x128xbf16>, vector<128x8xbf16>, vector<2x8xf32> -> vector<2x8xf32>
    %c0_21 = arith.constant 0 : index
    %c0_22 = arith.constant 0 : index
    %33 = vector.load %arg9[%c0_21, %c0_22] : memref<1x8xf32, #tpu.memory_space<vmem>>, vector<1x8xf32>
    %34 = vector.broadcast %33 : vector<1x8xf32> to vector<2x8xf32>
    %35 = arith.addf %32, %34 : vector<2x8xf32>
    %c0_23 = arith.constant 0 : index
    %c0_24 = arith.constant 0 : index
    %36 = vector.load %arg10[%c0_23, %c0_24] : memref<2x8xf32, #tpu.memory_space<vmem>>, vector<2x8xf32>
    tpu.vector_store %arg10[%c0_23, %c0_24], %35 {strides = array<i32>} : memref<2x8xf32, #tpu.memory_space<vmem>>, vector<2x8xf32>,
    return
  }
  func.func @transform_0(%arg0: i32) -> (i32, i32) {
    %c0_i32 = arith.constant 0 : i32
    %c0_i32_0 = arith.constant 0 : i32
    return %arg0, %c0_i32 : i32, i32
  }
  func.func @transform_1(%arg0: i32) -> (i32, i32) {
    %c0_i32 = arith.constant 0 : i32
    %c0_i32_0 = arith.constant 0 : i32
    %c0_i32_1 = arith.constant 0 : i32
    return %c0_i32, %c0_i32_0 : i32, i32
  }
  func.func @transform_2(%arg0: i32) -> (i32, i32) {
    %c0_i32 = arith.constant 0 : i32
    %c0_i32_0 = arith.constant 0 : i32
    %c0_i32_1 = arith.constant 0 : i32
    return %c0_i32, %c0_i32_0 : i32, i32
  }
  func.func @transform_3(%arg0: i32) -> (i32, i32) {
    %c0_i32 = arith.constant 0 : i32
    %c0_i32_0 = arith.constant 0 : i32
    %c0_i32_1 = arith.constant 0 : i32
    return %c0_i32, %c0_i32_0 : i32, i32
  }
  func.func @transform_4(%arg0: i32) -> (i32, i32) {
    %c0_i32 = arith.constant 0 : i32
    %c0_i32_0 = arith.constant 0 : i32
    %c0_i32_1 = arith.constant 0 : i32
    return %c0_i32, %c0_i32_0 : i32, i32
  }
  func.func @transform_5(%arg0: i32) -> (i32, i32) {
    %c0_i32 = arith.constant 0 : i32
    %c0_i32_0 = arith.constant 0 : i32
    %c0_i32_1 = arith.constant 0 : i32
    return %c0_i32, %c0_i32_0 : i32, i32
  }
  func.func @transform_6(%arg0: i32) -> (i32, i32) {
    %c0_i32 = arith.constant 0 : i32
    %c0_i32_0 = arith.constant 0 : i32
    %c0_i32_1 = arith.constant 0 : i32
    return %c0_i32, %c0_i32_0 : i32, i32
  }
  func.func @transform_7(%arg0: i32) -> (i32, i32) {
    %c0_i32 = arith.constant 0 : i32
    %c0_i32_0 = arith.constant 0 : i32
    %c0_i32_1 = arith.constant 0 : i32
    return %c0_i32, %c0_i32_0 : i32, i32
  }
  func.func @transform_8(%arg0: i32) -> (i32, i32) {
    %c0_i32 = arith.constant 0 : i32
    %c0_i32_0 = arith.constant 0 : i32
    %c0_i32_1 = arith.constant 0 : i32
    return %c0_i32, %c0_i32_0 : i32, i32
  }
  func.func @transform_9(%arg0: i32) -> (i32, i32) {
    %c0_i32 = arith.constant 0 : i32
    %c0_i32_0 = arith.constant 0 : i32
    return %arg0, %c0_i32 : i32, i32
  }
}

</mosaic_0001>

<llo_original>
// kernel: tpu_custom_call.1
$region0: #{tpu_custom_call.1}
  #allocation0 [shape = 'u32[]', space=smem, size = 0x4, offset = 0x4, fixed_abs, tag = 'smem constant byte address 0x4 - core index']
  #allocation1 [shape = 'u32[72,128]{1,0:T(1,128)}', space=vmem, size = 0x9000, scoped, tag = 'internal scratch']
  %s0 = inlined_call_operand.vmem [shape: bf16[2,80], index: 0, kind: input, shape index: {}]
  %s1 = inlined_call_operand.vmem [shape: bf16[80,128], index: 1, kind: input, shape index: {}]
  %s2 = inlined_call_operand.vmem [shape: f32[1,128], index: 2, kind: input, shape index: {}]
  %s3 = inlined_call_operand.vmem [shape: bf16[112,32], index: 3, kind: input, shape index: {}]
  %s4 = inlined_call_operand.vmem [shape: f32[1,32], index: 4, kind: input, shape index: {}]
  %s5 = inlined_call_operand.vmem [shape: bf16[16,128], index: 5, kind: input, shape index: {}]
  %s6 = inlined_call_operand.vmem [shape: f32[1,128], index: 6, kind: input, shape index: {}]
  %s7 = inlined_call_operand.vmem [shape: bf16[128,8], index: 7, kind: input, shape index: {}]
  %s8 = inlined_call_operand.vmem [shape: f32[1,8], index: 8, kind: input, shape index: {}]
  %s9 = inlined_call_operand.hbm [shape: f32[2,8], index: 9, kind: output, shape index: {}]
  %s10 = sld [smem:[#allocation0]]
  $region46: #{tpu_custom_call.1} parent=0
    _
  %s12 = ssub.s32 1, %s10
  %s13 = scalar_select 0, %s12, %s10
  $region1: #{tpu_custom_call.1} parent=0
    #allocation2 [shape = 'u8[1024]{0}', space=vmem, size = 0x400, scoped, tag = 'output window, operand 0, single buffered']
    #allocation3 [shape = 's32[1]{0}', space=sflag, size = 0x4, scoped, tag = 'scoped memory for tpu_custom_call.1']
    %14 = vsyncpa [#allocation3], 0
    // Predicated region
    $region2: #{tpu_custom_call.1} parent=1 // pred_check
      _
    $region3: #{tpu_custom_call.1} parent=1 // pred_check_branch
      %16 = sbr.rel (0) target = $region5
    $region4: #{tpu_custom_call.1} parent=1 // pred_region
      _
    $region5: #{tpu_custom_call.1} parent=1 // pred_fallthru
      _
    // Predicated region
    $region6: #{tpu_custom_call.1} parent=1 // pred_check
      _
    $region7: #{tpu_custom_call.1} parent=1 // pred_check_branch
      %18 = sbr.rel (0) target = $region9
    $region8: #{tpu_custom_call.1} parent=1 // pred_region
      _
    $region9: #{tpu_custom_call.1} parent=1 // pred_fallthru
      _
    // Predicated region
    $region10: #{tpu_custom_call.1} parent=1 // pred_check
      _
    $region11: #{tpu_custom_call.1} parent=1 // pred_check_branch
      %20 = sbr.rel (0) target = $region13
    $region12: #{tpu_custom_call.1} parent=1 // pred_region
      _
    $region13: #{tpu_custom_call.1} parent=1 // pred_fallthru
      _
    // Predicated region
    $region14: #{tpu_custom_call.1} parent=1 // pred_check
      _
    $region15: #{tpu_custom_call.1} parent=1 // pred_check_branch
      %22 = sbr.rel (0) target = $region17
    $region16: #{tpu_custom_call.1} parent=1 // pred_region
      _
    $region17: #{tpu_custom_call.1} parent=1 // pred_fallthru
      _
    // Predicated region
    $region18: #{tpu_custom_call.1} parent=1 // pred_check
      _
    $region19: #{tpu_custom_call.1} parent=1 // pred_check_branch
      %24 = sbr.rel (0) target = $region21
    $region20: #{tpu_custom_call.1} parent=1 // pred_region
      _
    $region21: #{tpu_custom_call.1} parent=1 // pred_fallthru
      _
    // Predicated region
    $region22: #{tpu_custom_call.1} parent=1 // pred_check
      _
    $region23: #{tpu_custom_call.1} parent=1 // pred_check_branch
      %26 = sbr.rel (0) target = $region25
    $region24: #{tpu_custom_call.1} parent=1 // pred_region
      _
    $region25: #{tpu_custom_call.1} parent=1 // pred_fallthru
      _
    // Predicated region
    $region26: #{tpu_custom_call.1} parent=1 // pred_check
      _
    $region27: #{tpu_custom_call.1} parent=1 // pred_check_branch
      %28 = sbr.rel (0) target = $region29
    $region28: #{tpu_custom_call.1} parent=1 // pred_region
      _
    $region29: #{tpu_custom_call.1} parent=1 // pred_fallthru
      _
    // Predicated region
    $region30: #{tpu_custom_call.1} parent=1 // pred_check
      _
    $region31: #{tpu_custom_call.1} parent=1 // pred_check_branch
      %30 = sbr.rel (0) target = $region33
    $region32: #{tpu_custom_call.1} parent=1 // pred_region
      _
    $region33: #{tpu_custom_call.1} parent=1 // pred_fallthru
      _
    // Predicated region
    $region34: #{tpu_custom_call.1} parent=1 // pred_check
      _
    $region35: #{tpu_custom_call.1} parent=1 // pred_check_branch
      %32 = sbr.rel (0) target = $region37
    $region36: #{tpu_custom_call.1} parent=1 // pred_region
      _
    $region37: #{tpu_custom_call.1} parent=1 // pred_fallthru
      _
    %v34 = vld [vmem:[%s0] sm:$0x1]
    %v35 = vld [vmem:[%s1] sm:$0xf]
    %v36 = vld [vmem:[%s1 + $0x4] sm:$0xf]
    %v37 = vld [vmem:[%s1 + $0x8] sm:$0xf]
    %v38 = vld [vmem:[%s1 + $0xc] sm:$0xf]
    %v39 = vld [vmem:[%s1 + $0x10] sm:$0xf]
    %v40 = vld [vmem:[%s1 + $0x14] sm:$0xf]
    %v41 = vld [vmem:[%s1 + $0x18] sm:$0xf]
    %v42 = vld [vmem:[%s1 + $0x1c] sm:$0xf]
    %v43 = vld [vmem:[%s1 + $0x20] sm:$0xf]
    %v44 = vld [vmem:[%s1 + $0x24] sm:$0xf]
    %v45 = vld [vmem:[%s2] sm:$0x1]
    %v47 = vperm.slane %v45, 0
    %v59 = vunpack.c.l.b16 %v35
    %v60 = vunpack.c.l.b16 %v36
    %v61 = vunpack.c.l.b16 %v37
    %v62 = vunpack.c.l.b16 %v38
    %v63 = vunpack.c.l.b16 %v39
    %v64 = vunpack.c.l.b16 %v40
    %v65 = vunpack.c.l.b16 %v41
    %v66 = vunpack.c.l.b16 %v42
    %v67 = vunpack.c.l.b16 %v43
    %v68 = vunpack.c.l.b16 %v44
    %v69 = vpack.c.b16 %v60, %v59
    %v70 = vpack.c.b16 %v62, %v61
    %v71 = vpack.c.b16 %v64, %v63
    %v72 = vpack.c.b16 %v66, %v65
    %v73 = vpack.c.b16 %v68, %v67
    %vm79 = vcmask 654336
    %v81 = vsel %vm79, %v34, 0
    %83 = vmatpush.bf16.msra.mxu0 0
    %84 = vmatpush.bf16.msra.mxu0 0
    %85 = vmatpush.bf16.msra.mxu0 0
    %86 = vmatpush.bf16.msra.mxu0 %v73
    %87 = vmatpush.bf16.msra.mxu0 %v72
    %88 = vmatpush.bf16.msra.mxu0 %v71
    %89 = vmatpush.bf16.msra.mxu0 %v70
    %90 = vmatpush.bf16.msra.mxu0 %v69
    %91 = vmatmul.bf16.gmra.mxu0 %v81
    %v92 = vpop.f32.mrf.mxu0
    %v93 = vadd.f32 %v47, %v92
    %v94 = vpop.f32.mrf.mxu0
    %95 = vdwg.mxu0
    %v96 = vmax.f32 %v93, 0.0
    %98 = vrot.lane.b32.xlu0 %v96, 112
    %v99 = vpop.permute.xlu0 %98
    %v101 = vmax.f32 %v96, %v99
    %v102 = vpack.c.bf16 %v101, %v101
    %v103 = vld [vmem:[%s3] sm:$0xf]
    %v104 = vld [vmem:[%s3 + $0x4] sm:$0xf]
    %v105 = vld [vmem:[%s3 + $0x8] sm:$0xf]
    %v106 = vld [vmem:[%s3 + $0xc] sm:$0xf]
    %v107 = vld [vmem:[%s3 + $0x10] sm:$0xf]
    %v108 = vld [vmem:[%s3 + $0x14] sm:$0xf]
    %v109 = vld [vmem:[%s3 + $0x18] sm:$0xf]
    %v110 = vld [vmem:[%s3 + $0x1c] sm:$0xf]
    %v111 = vld [vmem:[%s3 + $0x20] sm:$0xf]
    %v112 = vld [vmem:[%s3 + $0x24] sm:$0xf]
    %v113 = vld [vmem:[%s3 + $0x28] sm:$0xf]
    %v114 = vld [vmem:[%s3 + $0x2c] sm:$0xf]
    %v115 = vld [vmem:[%s3 + $0x30] sm:$0xf]
    %v116 = vld [vmem:[%s3 + $0x34] sm:$0xf]
    %v117 = vld [vmem:[%s4] sm:$0x1]
    %v119 = vperm.slane %v117, 0
    %v135 = vunpack.c.l.b16 %v103
    %v136 = vunpack.c.l.b16 %v104
    %v137 = vunpack.c.l.b16 %v105
    %v138 = vunpack.c.l.b16 %v106
    %v139 = vunpack.c.l.b16 %v107
    %v140 = vunpack.c.l.b16 %v108
    %v141 = vunpack.c.l.b16 %v109
    %v142 = vunpack.c.l.b16 %v110
    %v143 = vunpack.c.l.b16 %v111
    %v144 = vunpack.c.l.b16 %v112
    %v145 = vunpack.c.l.b16 %v113
    %v146 = vunpack.c.l.b16 %v114
    %v147 = vunpack.c.l.b16 %v115
    %v148 = vunpack.c.l.b16 %v116
    %v149 = vpack.c.b16 %v136, %v135
    %v150 = vpack.c.b16 %v138, %v137
    %v151 = vpack.c.b16 %v140, %v139
    %v152 = vpack.c.b16 %v142, %v141
    %v153 = vpack.c.b16 %v144, %v143
    %v154 = vpack.c.b16 %v146, %v145
    %v155 = vpack.c.b16 %v148, %v147
    %vm163 = vcmask 916480
    %v165 = vsel %vm163, %v102, 0
    %167 = vmatpush.bf16.msra.mxu0 0
    %168 = vmatpush.bf16.msra.mxu0 %v155
    %169 = vmatpush.bf16.msra.mxu0 %v154
    %170 = vmatpush.bf16.msra.mxu0 %v153
    %171 = vmatpush.bf16.msra.mxu0 %v152
    %172 = vmatpush.bf16.msra.mxu0 %v151
    %173 = vmatpush.bf16.msra.mxu0 %v150
    %174 = vmatpush.bf16.msra.mxu0 %v149
    %175 = vmatmul.bf16.gmra.mxu0 %v165
    %v176 = vpop.f32.mrf.mxu0
    %v177 = vadd.f32 %v119, %v176
    %v178 = vpop.f32.mrf.mxu0
    %179 = vdwg.mxu0
    %v180 = vmax.f32 %v177, 0.0
    %182 = vrot.lane.b32.xlu0 %v180, 112
    %v183 = vpop.permute.xlu0 %182
    %v185 = vmax.f32 %v180, %v183
    %v186 = vpack.c.bf16 %v185, %v185
    %v187 = vld [vmem:[%s5] sm:$0xf]
    %v188 = vld [vmem:[%s5 + $0x4] sm:$0xf]
    %v189 = vld [vmem:[%s6] sm:$0x1]
    %v191 = vperm.slane %v189, 0
    %v195 = vunpack.c.l.b16 %v187
    %v196 = vunpack.c.l.b16 %v188
    %v197 = vpack.c.b16 %v196, %v195
    %vm199 = vcmask 130048
    %v201 = vsel %vm199, %v186, 0
    %203 = vmatpush.bf16.msra.mxu0 0
    %204 = vmatpush.bf16.msra.mxu0 0
    %205 = vmatpush.bf16.msra.mxu0 0
    %206 = vmatpush.bf16.msra.mxu0 0
    %207 = vmatpush.bf16.msra.mxu0 0
    %208 = vmatpush.bf16.msra.mxu0 0
    %209 = vmatpush.bf16.msra.mxu0 0
    %210 = vmatpush.bf16.msra.mxu0 %v197
    %211 = vmatmul.bf16.gmra.mxu0 %v201
    %v212 = vpop.f32.mrf.mxu0
    %v213 = vadd.f32 %v191, %v212
    %v214 = vpop.f32.mrf.mxu0
    %215 = vdwg.mxu0
    %v216 = vmax.f32 %v213, 0.0
    %v217 = vpack.c.bf16 %v216, %v216
    %v218 = vld [vmem:[%s7] sm:$0xf]
    %v219 = vld [vmem:[%s7 + $0x4] sm:$0xf]
    %v220 = vld [vmem:[%s7 + $0x8] sm:$0xf]
    %v221 = vld [vmem:[%s7 + $0xc] sm:$0xf]
    %v222 = vld [vmem:[%s7 + $0x10] sm:$0xf]
    %v223 = vld [vmem:[%s7 + $0x14] sm:$0xf]
    %v224 = vld [vmem:[%s7 + $0x18] sm:$0xf]
    %v225 = vld [vmem:[%s7 + $0x1c] sm:$0xf]
    %v226 = vld [vmem:[%s7 + $0x20] sm:$0xf]
    %v227 = vld [vmem:[%s7 + $0x24] sm:$0xf]
    %v228 = vld [vmem:[%s7 + $0x28] sm:$0xf]
    %v229 = vld [vmem:[%s7 + $0x2c] sm:$0xf]
    %v230 = vld [vmem:[%s7 + $0x30] sm:$0xf]
    %v231 = vld [vmem:[%s7 + $0x34] sm:$0xf]
    %v232 = vld [vmem:[%s7 + $0x38] sm:$0xf]
    %v233 = vld [vmem:[%s7 + $0x3c] sm:$0xf]
    %v234 = vld [vmem:[%s8] sm:$0x1]
    %v236 = vperm.slane %v234, 0
    %v254 = vunpack.c.l.b16 %v218
    %v255 = vunpack.c.l.b16 %v219
    %v256 = vunpack.c.l.b16 %v220
    %v257 = vunpack.c.l.b16 %v221
    %v258 = vunpack.c.l.b16 %v222
    %v259 = vunpack.c.l.b16 %v223
    %v260 = vunpack.c.l.b16 %v224
    %v261 = vunpack.c.l.b16 %v225
    %v262 = vunpack.c.l.b16 %v226
    %v263 = vunpack.c.l.b16 %v227
    %v264 = vunpack.c.l.b16 %v228
    %v265 = vunpack.c.l.b16 %v229
    %v266 = vunpack.c.l.b16 %v230
    %v267 = vunpack.c.l.b16 %v231
    %v268 = vunpack.c.l.b16 %v232
    %v269 = vunpack.c.l.b16 %v233
    %v270 = vpack.c.b16 %v255, %v254
    %v271 = vpack.c.b16 %v257, %v256
    %v272 = vpack.c.b16 %v259, %v258
    %v273 = vpack.c.b16 %v261, %v260
    %v274 = vpack.c.b16 %v263, %v262
    %v275 = vpack.c.b16 %v265, %v264
    %v276 = vpack.c.b16 %v267, %v266
    %v277 = vpack.c.b16 %v269, %v268
    %286 = vmatpush.bf16.msra.mxu0 %v277
    %287 = vmatpush.bf16.msra.mxu0 %v276
    %288 = vmatpush.bf16.msra.mxu0 %v275
    %289 = vmatpush.bf16.msra.mxu0 %v274
    %290 = vmatpush.bf16.msra.mxu0 %v273
    %291 = vmatpush.bf16.msra.mxu0 %v272
    %292 = vmatpush.bf16.msra.mxu0 %v271
    %293 = vmatpush.bf16.msra.mxu0 %v270
    %294 = vmatmul.bf16.gmra.mxu0 %v217
    %v295 = vpop.f32.mrf.mxu0
    %v296 = vadd.f32 %v236, %v295
    %v297 = vpop.f32.mrf.mxu0
    %298 = vdwg.mxu0
    %vm299 = vcmask 58368
    %300 = vst.msk [vmem:[#allocation2] sm:$0x3] %vm299, %v296
    // Predicated region
    $region38: #{tpu_custom_call.1} parent=1 // pred_check
      _
    $region39: #{tpu_custom_call.1} parent=1 // pred_check_branch
      %302 = sbr.rel (0) target = $region41
    $region40: #{tpu_custom_call.1} parent=1 // pred_region
      %304 = vsyncadd [#allocation3], 0
      %s306 = sshll.u32 [#allocation2], 4
      %s307 = int_to_ptr.vmem [resolvable:$true] %s306
      %s308 = sshll.u32 %s9, 4
      %s309 = int_to_ptr.hbm [resolvable:$true] %s308
      %311 = dma.vmem_to_hbm [thread:$0]  %s307, 32, %s309, [#allocation3]
    $region41: #{tpu_custom_call.1} parent=1 // pred_fallthru
      _
    // Predicated region
    $region42: #{tpu_custom_call.1} parent=1 // pred_check
      _
    $region43: #{tpu_custom_call.1} parent=1 // pred_check_branch
      %313 = sbr.rel (0) target = $region45
    $region44: #{tpu_custom_call.1} parent=1 // pred_region
      %315 = dma.done [#allocation3], 32
    $region45: #{tpu_custom_call.1} parent=1 // pred_fallthru
      _
    %316 = vsyncpa [#allocation3], 1

</llo_original>
